<compile_context>
chip_gen: v7x
topology: tpu7x:2x2x1
jax: 0.10.0
libtpu: 0.0.40
codegen_flags: <defaults>
</compile_context>

<pallas_src>
import jax
import jax.numpy as jnp
import numpy as np
from jax.experimental import pallas as pl
from jax.experimental.pallas import tpu as pltpu


def _conv_mm_kernel(w_ref, b_ref, x_ref, o_ref):
    # w_ref: (Cout, K)      conv weight as a matmul LHS, resident across steps
    # b_ref: (Cout, 1)      bias, resident across steps
    # x_ref: (K, M_blk)     im2col columns for this block (lane-dense in M)
    # o_ref: (Cout, M_blk)  lane-dense output block
    acc = jnp.dot(w_ref[...], x_ref[...], preferred_element_type=jnp.float32)
    o_ref[...] = (acc + b_ref[...].astype(jnp.float32)).astype(o_ref.dtype)


def synapse_conv_forward(spike, weight, bias, *, stride=1, padding=1,
                         max_m_block=8192):
    """SYNAPSE_CONV.forward for sstep=False.

    spike : (T, B, Cin, H, W)  float32 (PyTorch NCHW convention per frame)
    weight: (Cout, Cin, KH, KW) (PyTorch Conv2d layout)
    bias  : (Cout,)
    returns (T, B, Cout, Ho, Wo)
    """
    T, B, Cin, H, W = spike.shape
    Cout, Cin_w, KH, KW = weight.shape
    assert Cin_w == Cin
    N = T * B
    Ho = (H + 2 * padding - KH) // stride + 1
    Wo = (W + 2 * padding - KW) // stride + 1
    K = Cin * KH * KW
    M = N * Ho * Wo

    # ---- glue: im2col in plain JAX (layout prep only; matmul is in-kernel) --
    x = spike.reshape(N, Cin, H, W)
    xp = jnp.pad(x, ((0, 0), (0, 0), (padding, padding), (padding, padding)))
    taps = []
    for kh in range(KH):
        for kw in range(KW):
            hs = slice(kh, kh + stride * (Ho - 1) + 1, stride)
            ws = slice(kw, kw + stride * (Wo - 1) + 1, stride)
            taps.append(xp[:, :, hs, ws])               # (N, Cin, Ho, Wo)
    # reduction ordering (cin, kh, kw) matches weight.reshape(Cout, -1)
    patches = jnp.stack(taps, axis=2)                   # (N, Cin, KH*KW, Ho, Wo)
    patches = patches.reshape(N, K, Ho * Wo)
    lhsT = jnp.transpose(patches, (1, 0, 2)).reshape(K, M)   # (K, M), lanes = M

    w2 = weight.reshape(Cout, K)                         # (Cout, K)
    b2 = bias.reshape(Cout, 1)                           # (Cout, 1)

    # ---- block sizing: a few fat, lane-aligned steps over M -----------------
    m_blk = 128 * pl.cdiv(M, 2 * 128)    # aim for 2 steps (v7x 2-TC megacore)
    m_blk = min(m_blk, max_m_block)      # cap per-step VMEM for big problems
    m_pad = m_blk * pl.cdiv(M, m_blk)
    n_blocks = m_pad // m_blk
    if m_pad > M:
        lhsT = jnp.pad(lhsT, ((0, 0), (0, m_pad - M)))

    itemsize = jnp.dtype(spike.dtype).itemsize
    cost = pl.CostEstimate(
        flops=2 * M * K * Cout,
        transcendentals=0,
        bytes_accessed=(K * m_pad + Cout * K + Cout + Cout * m_pad) * itemsize,
    )

    out = pl.pallas_call(
        _conv_mm_kernel,
        out_shape=jax.ShapeDtypeStruct((Cout, m_pad), spike.dtype),
        grid_spec=pltpu.PrefetchScalarGridSpec(
            num_scalar_prefetch=0,
            grid=(n_blocks,),
            in_specs=[
                pl.BlockSpec((Cout, K), lambda m: (0, 0)),   # weight, resident
                pl.BlockSpec((Cout, 1), lambda m: (0, 0)),   # bias, resident
                pl.BlockSpec((K, m_blk), lambda m: (0, m)),  # im2col columns
            ],
            out_specs=pl.BlockSpec((Cout, m_blk), lambda m: (0, m)),
        ),
        compiler_params=pltpu.CompilerParams(
            dimension_semantics=("parallel",),
            vmem_limit_bytes=32 * 1024 * 1024,
        ),
        cost_estimate=cost,
    )(w2, b2, lhsT)

    # ---- glue: back to PyTorch (T, B, Cout, Ho, Wo) --------------------------
    out = out[:, :M].reshape(Cout, N, Ho, Wo)
    out = jnp.transpose(out, (1, 0, 2, 3))               # (N, Cout, Ho, Wo)
    return out.reshape(T, B, Cout, Ho, Wo)


if __name__ == "__main__":
    # Module config: in_channels=4, out_channels=8, kernel=3, stride=1,
    # padding=1, TIME=8, bias=True, sstep=False.
    TIME, Bsz, Cin, Cout, H, W, Kk = 8, 2, 4, 8, 16, 16, 3

    key = jax.random.PRNGKey(0)
    k_spike, k_w, k_b = jax.random.split(key, 3)

    # deterministic synthetic parameters (shapes per nn.Conv2d in __init__)
    fan_in = Cin * Kk * Kk
    bound = 1.0 / np.sqrt(fan_in)
    weight = jax.random.uniform(k_w, (Cout, Cin, Kk, Kk), jnp.float32,
                                minval=-bound, maxval=bound)
    bias = jax.random.uniform(k_b, (Cout,), jnp.float32,
                              minval=-bound, maxval=bound)

    # binary "spike" input, shape (T, B, Cin, H, W)
    spike = (jax.random.uniform(k_spike, (TIME, Bsz, Cin, H, W)) > 0.5
             ).astype(jnp.float32)

    out = jax.jit(synapse_conv_forward)(spike, weight, bias)
    out = jax.block_until_ready(out)

    # reference check against XLA conv (same semantics as nn.Conv2d)
    x_flat = spike.reshape(TIME * Bsz, Cin, H, W)
    ref = jax.lax.conv_general_dilated(
        x_flat, weight, window_strides=(1, 1), padding=((1, 1), (1, 1)),
        dimension_numbers=("NCHW", "OIHW", "NCHW"))
    ref = ref + bias.reshape(1, Cout, 1, 1)
    ref = ref.reshape(TIME, Bsz, Cout, H, W)

    np.testing.assert_allclose(np.asarray(out), np.asarray(ref),
                               rtol=1e-5, atol=1e-5)
    print("KERNEL_OK")
</pallas_src>

<mosaic_0001>
module attributes {stable_mosaic.version = 11 : i64} {
  func.func @_conv_mm_kernel(%arg0: i32, %arg1: memref<8x36xf32, #tpu.memory_space<vmem>>, %arg2: memref<8x1xf32, #tpu.memory_space<vmem>>, %arg3: memref<36x2048xf32, #tpu.memory_space<vmem>>, %arg4: memref<8x2048xf32, #tpu.memory_space<vmem>>) attributes {dimension_semantics = [#tpu.dimension_semantics<parallel>], iteration_bounds = array<i64: 2>, scalar_prefetch = 0 : i64, scratch_operands = 0 : i64, tpu.core_type = #tpu.core_type<tc>, window_params = [{pipeline_mode = #tpu.pipeline_mode<synchronous>, transform_indices = @transform_0, window_bounds = array<i64: 8, 36>}, {pipeline_mode = #tpu.pipeline_mode<synchronous>, transform_indices = @transform_1, window_bounds = array<i64: 8, 1>}, {transform_indices = @transform_2, window_bounds = array<i64: 36, 2048>}, {transform_indices = @transform_3, window_bounds = array<i64: 8, 2048>}]} {
    %c0 = arith.constant 0 : index
    %c0_0 = arith.constant 0 : index
    %0 = vector.load %arg1[%c0, %c0_0] : memref<8x36xf32, #tpu.memory_space<vmem>>, vector<8x36xf32>
    %c0_1 = arith.constant 0 : index
    %c0_2 = arith.constant 0 : index
    %1 = vector.load %arg3[%c0_1, %c0_2] : memref<36x2048xf32, #tpu.memory_space<vmem>>, vector<36x2048xf32>
    %cst = arith.constant dense<0.000000e+00> : vector<8x2048xf32>
    %2 = tpu.matmul %0, %1, %cst {dimension_numbers = #tpu.dot_dimension_numbers<[1], [0], [0], [1], [0, 0, 1, 1], [], []>} : vector<8x36xf32>, vector<36x2048xf32>, vector<8x2048xf32> -> vector<8x2048xf32>
    %c0_3 = arith.constant 0 : index
    %c0_4 = arith.constant 0 : index
    %3 = vector.load %arg2[%c0_3, %c0_4] : memref<8x1xf32, #tpu.memory_space<vmem>>, vector<8x1xf32>
    %4 = vector.broadcast %3 : vector<8x1xf32> to vector<8x2048xf32>
    %5 = arith.addf %2, %4 : vector<8x2048xf32>
    %c0_5 = arith.constant 0 : index
    %c0_6 = arith.constant 0 : index
    %6 = vector.load %arg4[%c0_5, %c0_6] : memref<8x2048xf32, #tpu.memory_space<vmem>>, vector<8x2048xf32>
    tpu.vector_store %arg4[%c0_5, %c0_6], %5 {strides = array<i32>} : memref<8x2048xf32, #tpu.memory_space<vmem>>, vector<8x2048xf32>,
    return
  }
  func.func @transform_0(%arg0: i32) -> (i32, i32) {
    %c0_i32 = arith.constant 0 : i32
    %c0_i32_0 = arith.constant 0 : i32
    %c0_i32_1 = arith.constant 0 : i32
    return %c0_i32, %c0_i32_0 : i32, i32
  }
  func.func @transform_1(%arg0: i32) -> (i32, i32) {
    %c0_i32 = arith.constant 0 : i32
    %c0_i32_0 = arith.constant 0 : i32
    %c0_i32_1 = arith.constant 0 : i32
    return %c0_i32, %c0_i32_0 : i32, i32
  }
  func.func @transform_2(%arg0: i32) -> (i32, i32) {
    %c0_i32 = arith.constant 0 : i32
    %c0_i32_0 = arith.constant 0 : i32
    return %c0_i32, %arg0 : i32, i32
  }
  func.func @transform_3(%arg0: i32) -> (i32, i32) {
    %c0_i32 = arith.constant 0 : i32
    %c0_i32_0 = arith.constant 0 : i32
    return %c0_i32, %arg0 : i32, i32
  }
}

</mosaic_0001>

<llo_original>
// kernel: synapse_conv_forward.1
$region0: #{synapse_conv_forward.1}
  #allocation0 [shape = 'u32[]', space=smem, size = 0x4, offset = 0x4, fixed_abs, tag = 'smem constant byte address 0x4 - core index']
  #allocation1 [shape = 'u32[144,128]{1,0:T(1,128)}', space=vmem, size = 0x12000, scoped, tag = 'internal scratch']
  %s0 = inlined_call_operand.vmem [shape: f32[8,36], index: 0, kind: input, shape index: {}]
  %s1 = inlined_call_operand.vmem [shape: f32[8,1], index: 1, kind: input, shape index: {}]
  %s2 = inlined_call_operand.vmem [shape: f32[36,4096], index: 2, kind: input, shape index: {}]
  %s3 = inlined_call_operand.vmem [shape: f32[8,4096], index: 3, kind: output, shape index: {}]
  %s4 = sld [smem:[#allocation0]]
  $region68: #{synapse_conv_forward.1} parent=0
    _
  %s6 = ssub.s32 1, %s4
  %s7 = scalar_select 0, %s6, %s4
  $region1: #{synapse_conv_forward.1} parent=0
    #allocation2 [shape = 'u8[655360]{0}', space=vmem, size = 0xa0000, scoped, tag = 'input window, operand 2']
    loop: start=0, step=1, limit=4
    $region2: #{synapse_conv_forward.1} parent=1 // loop_pre_header
      _
    $region3: #{synapse_conv_forward.1} parent=1 // loop_header
      %s9 = sphi 0, %s13
      %p10 = scmp.ge.s32.totalorder %s9, 4
      %s17 = sphi 0, %s17
      %s19 = sphi 0, %s17
      %s20 = sphi 0, %s19
      %s34 = sphi 0, %s20
      %s38 = sphi 0, %s38
      %s40 = sphi 0, %s38
      %s41 = sphi 0, %s40
      %s55 = sphi 0, %s41
      %s61 = sphi 0, %s63
      %s64 = sphi 0, %s61
      %s65 = sphi 0, %s64
      %s81 = sphi 0, %s65
      %s87 = sphi 0, %s89
      %s90 = sphi 0, %s87
      %s91 = sphi 0, %s90
      %s107 = sphi 0, %s91
    $region4: #{synapse_conv_forward.1} parent=1 // loop_header_branch
      %12 = sbr.rel (%p10) target = $region8
    $region5: #{synapse_conv_forward.1} parent=1 // loop_body
      %s14 = ssub.s32 %s9, 1
      %s15 = ssub.s32 %s9, 2
      %s16 = sadd.s32 %s9, 1
      %s18 = sadd.s32 %s17, 1
      %p21 = scmp.eq.s32.totalorder %s9, 1
      %p22 = scmp.ne.s32.totalorder %s17, %s19
      %p23 = scmp.eq.s32.totalorder %s9, 0
      %p24 = por %p22, %p23
      %p25 = scmp.ne.s32.totalorder %s17, %s19
      %p26 = scmp.eq.s32.totalorder %s14, 1
      %p27 = por %p25, %p26
      %p28 = scmp.ne.s32.totalorder %s19, %s20
      %p29 = scmp.eq.s32.totalorder %s14, 0
      %p30 = por %p28, %p29
      %p31 = scmp.ne.s32.totalorder %s19, %s20
      %p32 = scmp.eq.s32.totalorder %s15, 1
      %p33 = por %p31, %p32
      %p35 = scmp.ne.s32.totalorder %s20, %s34
      %p36 = scmp.eq.s32.totalorder %s15, 0
      %p37 = por %p35, %p36
      %s39 = sadd.s32 %s38, 1
      %p42 = scmp.eq.s32.totalorder %s9, 1
      %p43 = scmp.ne.s32.totalorder %s38, %s40
      %p44 = scmp.eq.s32.totalorder %s9, 0
      %p45 = por %p43, %p44
      %p46 = scmp.ne.s32.totalorder %s38, %s40
      %p47 = scmp.eq.s32.totalorder %s14, 1
      %p48 = por %p46, %p47
      %p49 = scmp.ne.s32.totalorder %s40, %s41
      %p50 = scmp.eq.s32.totalorder %s14, 0
      %p51 = por %p49, %p50
      %p52 = scmp.ne.s32.totalorder %s40, %s41
      %p53 = scmp.eq.s32.totalorder %s15, 1
      %p54 = por %p52, %p53
      %p56 = scmp.ne.s32.totalorder %s41, %s55
      %p57 = scmp.eq.s32.totalorder %s15, 0
      %p58 = por %p56, %p57
      %s59 = ssub.s32 %s9, %s16
      %p60 = scmp.eq.s32.totalorder %s59, 0
      %s62 = sadd.s32 %s61, 1
      %s63 = scalar_select %p60, %s61, %s62
      %p66 = pneg %p60
      %p67 = scmp.eq.s32.totalorder %s9, 1
      %p68 = por %p66, %p67
      %p69 = scmp.ne.s32.totalorder %s61, %s64
      %p70 = scmp.eq.s32.totalorder %s9, 0
      %p71 = por %p69, %p70
      %p72 = scmp.ne.s32.totalorder %s61, %s64
      %p73 = scmp.eq.s32.totalorder %s14, 1
      %p74 = por %p72, %p73
      %p75 = scmp.ne.s32.totalorder %s64, %s65
      %p76 = scmp.eq.s32.totalorder %s14, 0
      %p77 = por %p75, %p76
      %p78 = scmp.ne.s32.totalorder %s64, %s65
      %p79 = scmp.eq.s32.totalorder %s15, 1
      %p80 = por %p78, %p79
      %p82 = scmp.ne.s32.totalorder %s65, %s81
      %p83 = scmp.eq.s32.totalorder %s15, 0
      %p84 = por %p82, %p83
      %s85 = ssub.s32 %s9, %s16
      %p86 = scmp.eq.s32.totalorder %s85, 0
      %s88 = sadd.s32 %s87, 1
      %s89 = scalar_select %p86, %s87, %s88
      %p92 = pneg %p86
      %p93 = scmp.eq.s32.totalorder %s9, 1
      %p94 = por %p92, %p93
      %p95 = scmp.ne.s32.totalorder %s87, %s90
      %p96 = scmp.eq.s32.totalorder %s9, 0
      %p97 = por %p95, %p96
      %p98 = scmp.ne.s32.totalorder %s87, %s90
      %p99 = scmp.eq.s32.totalorder %s14, 1
      %p100 = por %p98, %p99
      %p101 = scmp.ne.s32.totalorder %s90, %s91
      %p102 = scmp.eq.s32.totalorder %s14, 0
      %p103 = por %p101, %p102
      %p104 = scmp.ne.s32.totalorder %s90, %s91
      %p105 = scmp.eq.s32.totalorder %s15, 1
      %p106 = por %p104, %p105
      %p108 = scmp.ne.s32.totalorder %s91, %s107
      %p109 = scmp.eq.s32.totalorder %s15, 0
      %p110 = por %p108, %p109
      %p111 = scmp.le.s32.totalorder 1, %s9
      %p112 = scmp.lt.s32.totalorder %s9, 3
      %p113 = pnand %p111, %p112
      %p114 = pneg %p113
      // Predicated region
      $region9: #{synapse_conv_forward.1} parent=5 // pred_check
        _
      $region10: #{synapse_conv_forward.1} parent=5 // pred_check_branch
        %116 = sbr.rel (%p113) target = $region12
      $region11: #{synapse_conv_forward.1} parent=5 // pred_region
        %s117 = ssub.s32 %s9, 1
        // Predicated region
        $region13: #{synapse_conv_forward.1} parent=11 // pred_check
          %p118 = pneg %p30
        $region14: #{synapse_conv_forward.1} parent=11 // pred_check_branch
          %120 = sbr.rel (%p118) target = $region16
        $region15: #{synapse_conv_forward.1} parent=11 // pred_region
          _
        $region16: #{synapse_conv_forward.1} parent=11 // pred_fallthru
          _
        // Predicated region
        $region17: #{synapse_conv_forward.1} parent=11 // pred_check
          %p121 = pneg %p51
        $region18: #{synapse_conv_forward.1} parent=11 // pred_check_branch
          %123 = sbr.rel (%p121) target = $region20
        $region19: #{synapse_conv_forward.1} parent=11 // pred_region
          _
        $region20: #{synapse_conv_forward.1} parent=11 // pred_fallthru
          _
      $region12: #{synapse_conv_forward.1} parent=5 // pred_fallthru
        _
      %p124 = scmp.lt.s32.totalorder %s9, 2
      // Predicated region
      $region21: #{synapse_conv_forward.1} parent=5 // pred_check
        %p125 = pneg %p124
      $region22: #{synapse_conv_forward.1} parent=5 // pred_check_branch
        %127 = sbr.rel (%p125) target = $region24
      $region23: #{synapse_conv_forward.1} parent=5 // pred_region
        // Predicated region
        $region25: #{synapse_conv_forward.1} parent=23 // pred_check
          %p128 = pneg %p71
        $region26: #{synapse_conv_forward.1} parent=23 // pred_check_branch
          %130 = sbr.rel (%p128) target = $region28
        $region27: #{synapse_conv_forward.1} parent=23 // pred_region
          %s131 = sand.u32 %s61, 1
          %s132 = sand.u32 %s61, 1
          %s133 = smul.addr %s132, 640
          %s134 = scalar_lea.vmem [#allocation2], %s133
          %s135 = smul.u32 16, %s9
          %s136 = smul.addr %s135, 8
          %s137 = scalar_lea.vmem %s2, %s136
          // Predicated region
          $region29: #{synapse_conv_forward.1} parent=27 // pred_check
            _
          $region30: #{synapse_conv_forward.1} parent=27 // pred_check_branch
            %139 = sbr.rel (0) target = $region32
          $region31: #{synapse_conv_forward.1} parent=27 // pred_region
            // Predicated region
            $region33: #{synapse_conv_forward.1} parent=31 // pred_check
              _
            $region34: #{synapse_conv_forward.1} parent=31 // pred_check_branch
              %141 = sbr.rel (0) target = $region36
            $region35: #{synapse_conv_forward.1} parent=31 // pred_region
              loop: start=0, step=1, limit=1
              $region37: #{synapse_conv_forward.1} parent=35 // loop_pre_header
                _
              $region38: #{synapse_conv_forward.1} parent=35 // loop_header
                %s143 = sphi 0, %s147
                %p144 = scmp.ge.s32.totalorder %s143, 1
                %s148 = sphi %s137, %s137
                %s149 = sphi %s134, %s134
              $region39: #{synapse_conv_forward.1} parent=35 // loop_header_branch
                %146 = sbr.rel (%p144) target = $region43
              $region40: #{synapse_conv_forward.1} parent=35 // loop_body
                %v150 = vld [vmem:[%s148] sm:$0xff]
                %151 = vst [vmem:[%s149] sm:$0xff] %v150
                %v152 = vld [vmem:[%s148 + $0x8] sm:$0xff]
                %153 = vst [vmem:[%s149 + $0x8] sm:$0xff] %v152
                %v154 = vld [vmem:[%s148 + $0x10] sm:$0xff]
                %155 = vst [vmem:[%s149 + $0x10] sm:$0xff] %v154
                %v156 = vld [vmem:[%s148 + $0x18] sm:$0xff]
                %157 = vst [vmem:[%s149 + $0x18] sm:$0xff] %v156
                %v158 = vld [vmem:[%s148 + $0x20] sm:$0xff]
                %159 = vst [vmem:[%s149 + $0x20] sm:$0xff] %v158
                %v160 = vld [vmem:[%s148 + $0x28] sm:$0xff]
                %161 = vst [vmem:[%s149 + $0x28] sm:$0xff] %v160
                %v162 = vld [vmem:[%s148 + $0x30] sm:$0xff]
                %163 = vst [vmem:[%s149 + $0x30] sm:$0xff] %v162
                %v164 = vld [vmem:[%s148 + $0x38] sm:$0xff]
                %165 = vst [vmem:[%s149 + $0x38] sm:$0xff] %v164
                %v166 = vld [vmem:[%s148 + $0x40] sm:$0xff]
                %167 = vst [vmem:[%s149 + $0x40] sm:$0xff] %v166
                %v168 = vld [vmem:[%s148 + $0x48] sm:$0xff]
                %169 = vst [vmem:[%s149 + $0x48] sm:$0xff] %v168
                %v170 = vld [vmem:[%s148 + $0x50] sm:$0xff]
                %171 = vst [vmem:[%s149 + $0x50] sm:$0xff] %v170
                %v172 = vld [vmem:[%s148 + $0x58] sm:$0xff]
                %173 = vst [vmem:[%s149 + $0x58] sm:$0xff] %v172
                %v174 = vld [vmem:[%s148 + $0x60] sm:$0xff]
                %175 = vst [vmem:[%s149 + $0x60] sm:$0xff] %v174
                %v176 = vld [vmem:[%s148 + $0x68] sm:$0xff]
                %177 = vst [vmem:[%s149 + $0x68] sm:$0xff] %v176
                %v178 = vld [vmem:[%s148 + $0x70] sm:$0xff]
                %179 = vst [vmem:[%s149 + $0x70] sm:$0xff] %v178
                %v180 = vld [vmem:[%s148 + $0x78] sm:$0xff]
                %181 = vst [vmem:[%s149 + $0x78] sm:$0xff] %v180
                %v182 = vld [vmem:[%s148 + $0x100] sm:$0xff]
                %183 = vst [vmem:[%s149 + $0x80] sm:$0xff] %v182
                %v184 = vld [vmem:[%s148 + $0x108] sm:$0xff]
                %185 = vst [vmem:[%s149 + $0x88] sm:$0xff] %v184
                %v186 = vld [vmem:[%s148 + $0x110] sm:$0xff]
                %187 = vst [vmem:[%s149 + $0x90] sm:$0xff] %v186
                %v188 = vld [vmem:[%s148 + $0x118] sm:$0xff]
                %189 = vst [vmem:[%s149 + $0x98] sm:$0xff] %v188
                %v190 = vld [vmem:[%s148 + $0x120] sm:$0xff]
                %191 = vst [vmem:[%s149 + $0xa0] sm:$0xff] %v190
                %v192 = vld [vmem:[%s148 + $0x128] sm:$0xff]
                %193 = vst [vmem:[%s149 + $0xa8] sm:$0xff] %v192
                %v194 = vld [vmem:[%s148 + $0x130] sm:$0xff]
                %195 = vst [vmem:[%s149 + $0xb0] sm:$0xff] %v194
                %v196 = vld [vmem:[%s148 + $0x138] sm:$0xff]
                %197 = vst [vmem:[%s149 + $0xb8] sm:$0xff] %v196
                %v198 = vld [vmem:[%s148 + $0x140] sm:$0xff]
                %199 = vst [vmem:[%s149 + $0xc0] sm:$0xff] %v198
                %v200 = vld [vmem:[%s148 + $0x148] sm:$0xff]
                %201 = vst [vmem:[%s149 + $0xc8] sm:$0xff] %v200
                %v202 = vld [vmem:[%s148 + $0x150] sm:$0xff]
                %203 = vst [vmem:[%s149 + $0xd0] sm:$0xff] %v202
                %v204 = vld [vmem:[%s148 + $0x158] sm:$0xff]
                %205 = vst [vmem:[%s149 + $0xd8] sm:$0xff] %v204
                %v206 = vld [vmem:[%s148 + $0x160] sm:$0xff]
                %207 = vst [vmem:[%s149 + $0xe0] sm:$0xff] %v206
                %v208 = vld [vmem:[%s148 + $0x168] sm:$0xff]
                %209 = vst [vmem:[%s149 + $0xe8] sm:$0xff] %v208
                %v210 = vld [vmem:[%s148 + $0x170] sm:$0xff]
                %211 = vst [vmem:[%s149 + $0xf0] sm:$0xff] %v210
                %v212 = vld [vmem:[%s148 + $0x178] sm:$0xff]
                %213 = vst [vmem:[%s149 + $0xf8] sm:$0xff] %v212
                %v214 = vld [vmem:[%s148 + $0x200] sm:$0xff]
                %215 = vst [vmem:[%s149 + $0x100] sm:$0xff] %v214
                %v216 = vld [vmem:[%s148 + $0x208] sm:$0xff]
                %217 = vst [vmem:[%s149 + $0x108] sm:$0xff] %v216
                %v218 = vld [vmem:[%s148 + $0x210] sm:$0xff]
                %219 = vst [vmem:[%s149 + $0x110] sm:$0xff] %v218
                %v220 = vld [vmem:[%s148 + $0x218] sm:$0xff]
                %221 = vst [vmem:[%s149 + $0x118] sm:$0xff] %v220
                %v222 = vld [vmem:[%s148 + $0x220] sm:$0xff]
                %223 = vst [vmem:[%s149 + $0x120] sm:$0xff] %v222
                %v224 = vld [vmem:[%s148 + $0x228] sm:$0xff]
                %225 = vst [vmem:[%s149 + $0x128] sm:$0xff] %v224
                %v226 = vld [vmem:[%s148 + $0x230] sm:$0xff]
                %227 = vst [vmem:[%s149 + $0x130] sm:$0xff] %v226
                %v228 = vld [vmem:[%s148 + $0x238] sm:$0xff]
                %229 = vst [vmem:[%s149 + $0x138] sm:$0xff] %v228
                %v230 = vld [vmem:[%s148 + $0x240] sm:$0xff]
                %231 = vst [vmem:[%s149 + $0x140] sm:$0xff] %v230
                %v232 = vld [vmem:[%s148 + $0x248] sm:$0xff]
                %233 = vst [vmem:[%s149 + $0x148] sm:$0xff] %v232
                %v234 = vld [vmem:[%s148 + $0x250] sm:$0xff]
                %235 = vst [vmem:[%s149 + $0x150] sm:$0xff] %v234
                %v236 = vld [vmem:[%s148 + $0x258] sm:$0xff]
                %237 = vst [vmem:[%s149 + $0x158] sm:$0xff] %v236
                %v238 = vld [vmem:[%s148 + $0x260] sm:$0xff]
                %239 = vst [vmem:[%s149 + $0x160] sm:$0xff] %v238
                %v240 = vld [vmem:[%s148 + $0x268] sm:$0xff]
                %241 = vst [vmem:[%s149 + $0x168] sm:$0xff] %v240
                %v242 = vld [vmem:[%s148 + $0x270] sm:$0xff]
                %243 = vst [vmem:[%s149 + $0x170] sm:$0xff] %v242
                %v244 = vld [vmem:[%s148 + $0x278] sm:$0xff]
                %245 = vst [vmem:[%s149 + $0x178] sm:$0xff] %v244
                %v246 = vld [vmem:[%s148 + $0x300] sm:$0xff]
                %247 = vst [vmem:[%s149 + $0x180] sm:$0xff] %v246
                %v248 = vld [vmem:[%s148 + $0x308] sm:$0xff]
                %249 = vst [vmem:[%s149 + $0x188] sm:$0xff] %v248
                %v250 = vld [vmem:[%s148 + $0x310] sm:$0xff]
                %251 = vst [vmem:[%s149 + $0x190] sm:$0xff] %v250
                %v252 = vld [vmem:[%s148 + $0x318] sm:$0xff]
                %253 = vst [vmem:[%s149 + $0x198] sm:$0xff] %v252
                %v254 = vld [vmem:[%s148 + $0x320] sm:$0xff]
                %255 = vst [vmem:[%s149 + $0x1a0] sm:$0xff] %v254
                %v256 = vld [vmem:[%s148 + $0x328] sm:$0xff]
                %257 = vst [vmem:[%s149 + $0x1a8] sm:$0xff] %v256
                %v258 = vld [vmem:[%s148 + $0x330] sm:$0xff]
                %259 = vst [vmem:[%s149 + $0x1b0] sm:$0xff] %v258
                %v260 = vld [vmem:[%s148 + $0x338] sm:$0xff]
                %261 = vst [vmem:[%s149 + $0x1b8] sm:$0xff] %v260
                %v262 = vld [vmem:[%s148 + $0x340] sm:$0xff]
                %263 = vst [vmem:[%s149 + $0x1c0] sm:$0xff] %v262
                %v264 = vld [vmem:[%s148 + $0x348] sm:$0xff]
                %265 = vst [vmem:[%s149 + $0x1c8] sm:$0xff] %v264
                %v266 = vld [vmem:[%s148 + $0x350] sm:$0xff]
                %267 = vst [vmem:[%s149 + $0x1d0] sm:$0xff] %v266
                %v268 = vld [vmem:[%s148 + $0x358] sm:$0xff]
                %269 = vst [vmem:[%s149 + $0x1d8] sm:$0xff] %v268
                %v270 = vld [vmem:[%s148 + $0x360] sm:$0xff]
                %271 = vst [vmem:[%s149 + $0x1e0] sm:$0xff] %v270
                %v272 = vld [vmem:[%s148 + $0x368] sm:$0xff]
                %273 = vst [vmem:[%s149 + $0x1e8] sm:$0xff] %v272
                %v274 = vld [vmem:[%s148 + $0x370] sm:$0xff]
                %275 = vst [vmem:[%s149 + $0x1f0] sm:$0xff] %v274
                %v276 = vld [vmem:[%s148 + $0x378] sm:$0xff]
                %277 = vst [vmem:[%s149 + $0x1f8] sm:$0xff] %v276
                %v278 = vld [vmem:[%s148 + $0x400] sm:$0xff]
                %279 = vst [vmem:[%s149 + $0x200] sm:$0xff] %v278
                %v280 = vld [vmem:[%s148 + $0x408] sm:$0xff]
                %281 = vst [vmem:[%s149 + $0x208] sm:$0xff] %v280
                %v282 = vld [vmem:[%s148 + $0x410] sm:$0xff]
                %283 = vst [vmem:[%s149 + $0x210] sm:$0xff] %v282
                %v284 = vld [vmem:[%s148 + $0x418] sm:$0xff]
                %285 = vst [vmem:[%s149 + $0x218] sm:$0xff] %v284
                %v286 = vld [vmem:[%s148 + $0x420] sm:$0xff]
                %287 = vst [vmem:[%s149 + $0x220] sm:$0xff] %v286
                %v288 = vld [vmem:[%s148 + $0x428] sm:$0xff]
                %289 = vst [vmem:[%s149 + $0x228] sm:$0xff] %v288
                %v290 = vld [vmem:[%s148 + $0x430] sm:$0xff]
                %291 = vst [vmem:[%s149 + $0x230] sm:$0xff] %v290
                %v292 = vld [vmem:[%s148 + $0x438] sm:$0xff]
                %293 = vst [vmem:[%s149 + $0x238] sm:$0xff] %v292
                %v294 = vld [vmem:[%s148 + $0x440] sm:$0xff]
                %295 = vst [vmem:[%s149 + $0x240] sm:$0xff] %v294
                %v296 = vld [vmem:[%s148 + $0x448] sm:$0xff]
                %297 = vst [vmem:[%s149 + $0x248] sm:$0xff] %v296
                %v298 = vld [vmem:[%s148 + $0x450] sm:$0xff]
                %299 = vst [vmem:[%s149 + $0x250] sm:$0xff] %v298
                %v300 = vld [vmem:[%s148 + $0x458] sm:$0xff]
                %301 = vst [vmem:[%s149 + $0x258] sm:$0xff] %v300
                %v302 = vld [vmem:[%s148 + $0x460] sm:$0xff]
                %303 = vst [vmem:[%s149 + $0x260] sm:$0xff] %v302
                %v304 = vld [vmem:[%s148 + $0x468] sm:$0xff]
                %305 = vst [vmem:[%s149 + $0x268] sm:$0xff] %v304
                %v306 = vld [vmem:[%s148 + $0x470] sm:$0xff]
                %307 = vst [vmem:[%s149 + $0x270] sm:$0xff] %v306
                %v308 = vld [vmem:[%s148 + $0x478] sm:$0xff]
                %309 = vst [vmem:[%s149 + $0x278] sm:$0xff] %v308
              $region41: #{synapse_conv_forward.1} parent=35 // loop_footer
                %s147 = sadd.s32 1, %s143
              $region42: #{synapse_conv_forward.1} parent=35 // loop_footer_branch
                %142 = sbr.rel target = $region38
              $region43: #{synapse_conv_forward.1} parent=35 // loop_exit
                _
            $region36: #{synapse_conv_forward.1} parent=31 // pred_fallthru
              _
            // Predicated region
            $region44: #{synapse_conv_forward.1} parent=31 // pred_check
              _
            $region45: #{synapse_conv_forward.1} parent=31 // pred_check_branch
              %311 = sbr.rel target = $region47
            $region46: #{synapse_conv_forward.1} parent=31 // pred_region
              _
            $region47: #{synapse_conv_forward.1} parent=31 // pred_fallthru
              _
          $region32: #{synapse_conv_forward.1} parent=27 // pred_fallthru
            _
          %312 = vnop
        $region28: #{synapse_conv_forward.1} parent=23 // pred_fallthru
          _
      $region24: #{synapse_conv_forward.1} parent=5 // pred_fallthru
        _
      %p313 = scmp.le.s32.totalorder 1, %s9
      %p314 = scmp.lt.s32.totalorder %s9, 3
      %p315 = pnand %p313, %p314
      %p316 = pneg %p315
      // Predicated region
      $region48: #{synapse_conv_forward.1} parent=5 // pred_check
        _
      $region49: #{synapse_conv_forward.1} parent=5 // pred_check_branch
        %318 = sbr.rel (%p315) target = $region51
      $region50: #{synapse_conv_forward.1} parent=5 // pred_region
        %s319 = ssub.s32 %s9, 1
        %s320 = sand.u32 %s64, 1
        %s321 = sand.u32 %s64, 1
        %s322 = smul.addr %s321, 640
        %s323 = scalar_lea.vmem [#allocation2], %s322
        // Predicated region
        $region52: #{synapse_conv_forward.1} parent=50 // pred_check
          %p324 = pneg %p77
        $region53: #{synapse_conv_forward.1} parent=50 // pred_check_branch
          %326 = sbr.rel (%p324) target = $region55
        $region54: #{synapse_conv_forward.1} parent=50 // pred_region
          _
        $region55: #{synapse_conv_forward.1} parent=50 // pred_fallthru
          _
        %p327 = pneg %p30
        %p328 = pneg %p27
        %p329 = pneg %p51
        %p330 = pneg %p48
        %s331 = sand.u32 %s64, 1
        %s332 = sand.u32 %s64, 1
        %s333 = smul.addr %s332, 640
        %s334 = scalar_lea.vmem [#allocation2], %s333
        %p335 = pneg %p77
        %p336 = pneg %p74
        %p337 = pneg %p103
        %p338 = pneg %p100
        %s339 = smul.u32 16, %s14
        %p340 = scmp.lt.s32.totalorder %s339, 31
        %s341 = scalar_select %p340, %s339, 31
        %s342 = smul.addr %s341, 8
        %s343 = scalar_lea.vmem %s3, %s342
        %s344 = smul.u32 16, %s14
        %s345 = smul.u32 16, %s14
        %p346 = scmp.lt.s32.totalorder %s345, 31
        %s347 = scalar_select %p346, %s345, 31
        %s348 = smul.addr %s347, 8
        %s349 = scalar_lea.vmem %s3, %s348
        %s350 = smul.u32 16, %s14
        %v351 = vld [vmem:[%s0] sm:$0xff]
        %v352 = vld [vmem:[%s323] sm:$0xff]
        %v353 = vld [vmem:[%s323 + $0x8] sm:$0xff]
        %v354 = vld [vmem:[%s323 + $0x10] sm:$0xff]
        %v355 = vld [vmem:[%s323 + $0x18] sm:$0xff]
        %v356 = vld [vmem:[%s323 + $0x20] sm:$0xff]
        %v357 = vld [vmem:[%s323 + $0x28] sm:$0xff]
        %v358 = vld [vmem:[%s323 + $0x30] sm:$0xff]
        %v359 = vld [vmem:[%s323 + $0x38] sm:$0xff]
        %v360 = vld [vmem:[%s323 + $0x40] sm:$0xff]
        %v361 = vld [vmem:[%s323 + $0x48] sm:$0xff]
        %v362 = vld [vmem:[%s323 + $0x50] sm:$0xff]
        %v363 = vld [vmem:[%s323 + $0x58] sm:$0xff]
        %v364 = vld [vmem:[%s323 + $0x60] sm:$0xff]
        %v365 = vld [vmem:[%s323 + $0x68] sm:$0xff]
        %v366 = vld [vmem:[%s323 + $0x70] sm:$0xff]
        %v367 = vld [vmem:[%s323 + $0x78] sm:$0xff]
        %v368 = vld [vmem:[%s323 + $0x80] sm:$0xff]
        %v369 = vld [vmem:[%s323 + $0x88] sm:$0xff]
        %v370 = vld [vmem:[%s323 + $0x90] sm:$0xff]
        %v371 = vld [vmem:[%s323 + $0x98] sm:$0xff]
        %v372 = vld [vmem:[%s323 + $0xa0] sm:$0xff]
        %v373 = vld [vmem:[%s323 + $0xa8] sm:$0xff]
        %v374 = vld [vmem:[%s323 + $0xb0] sm:$0xff]
        %v375 = vld [vmem:[%s323 + $0xb8] sm:$0xff]
        %v376 = vld [vmem:[%s323 + $0xc0] sm:$0xff]
        %v377 = vld [vmem:[%s323 + $0xc8] sm:$0xff]
        %v378 = vld [vmem:[%s323 + $0xd0] sm:$0xff]
        %v379 = vld [vmem:[%s323 + $0xd8] sm:$0xff]
        %v380 = vld [vmem:[%s323 + $0xe0] sm:$0xff]
        %v381 = vld [vmem:[%s323 + $0xe8] sm:$0xff]
        %v382 = vld [vmem:[%s323 + $0xf0] sm:$0xff]
        %v383 = vld [vmem:[%s323 + $0xf8] sm:$0xff]
        %v384 = vld [vmem:[%s323 + $0x100] sm:$0xff]
        %v385 = vld [vmem:[%s323 + $0x108] sm:$0xff]
        %v386 = vld [vmem:[%s323 + $0x110] sm:$0xff]
        %v387 = vld [vmem:[%s323 + $0x118] sm:$0xff]
        %v388 = vld [vmem:[%s323 + $0x120] sm:$0xff]
        %v389 = vld [vmem:[%s323 + $0x128] sm:$0xff]
        %v390 = vld [vmem:[%s323 + $0x130] sm:$0xff]
        %v391 = vld [vmem:[%s323 + $0x138] sm:$0xff]
        %v392 = vld [vmem:[%s323 + $0x140] sm:$0xff]
        %v393 = vld [vmem:[%s323 + $0x148] sm:$0xff]
        %v394 = vld [vmem:[%s323 + $0x150] sm:$0xff]
        %v395 = vld [vmem:[%s323 + $0x158] sm:$0xff]
        %v396 = vld [vmem:[%s323 + $0x160] sm:$0xff]
        %v397 = vld [vmem:[%s323 + $0x168] sm:$0xff]
        %v398 = vld [vmem:[%s323 + $0x170] sm:$0xff]
        %v399 = vld [vmem:[%s323 + $0x178] sm:$0xff]
        %v400 = vld [vmem:[%s323 + $0x180] sm:$0xff]
        %v401 = vld [vmem:[%s323 + $0x188] sm:$0xff]
        %v402 = vld [vmem:[%s323 + $0x190] sm:$0xff]
        %v403 = vld [vmem:[%s323 + $0x198] sm:$0xff]
        %v404 = vld [vmem:[%s323 + $0x1a0] sm:$0xff]
        %v405 = vld [vmem:[%s323 + $0x1a8] sm:$0xff]
        %v406 = vld [vmem:[%s323 + $0x1b0] sm:$0xff]
        %v407 = vld [vmem:[%s323 + $0x1b8] sm:$0xff]
        %v408 = vld [vmem:[%s323 + $0x1c0] sm:$0xff]
        %v409 = vld [vmem:[%s323 + $0x1c8] sm:$0xff]
        %v410 = vld [vmem:[%s323 + $0x1d0] sm:$0xff]
        %v411 = vld [vmem:[%s323 + $0x1d8] sm:$0xff]
        %v412 = vld [vmem:[%s323 + $0x1e0] sm:$0xff]
        %v413 = vld [vmem:[%s323 + $0x1e8] sm:$0xff]
        %v414 = vld [vmem:[%s323 + $0x1f0] sm:$0xff]
        %v415 = vld [vmem:[%s323 + $0x1f8] sm:$0xff]
        %v416 = vld [vmem:[%s323 + $0x200] sm:$0xf]
        %v417 = vld [vmem:[%s323 + $0x208] sm:$0xf]
        %v418 = vld [vmem:[%s323 + $0x210] sm:$0xf]
        %v419 = vld [vmem:[%s323 + $0x218] sm:$0xf]
        %v420 = vld [vmem:[%s323 + $0x220] sm:$0xf]
        %v421 = vld [vmem:[%s323 + $0x228] sm:$0xf]
        %v422 = vld [vmem:[%s323 + $0x230] sm:$0xf]
        %v423 = vld [vmem:[%s323 + $0x238] sm:$0xf]
        %v424 = vld [vmem:[%s323 + $0x240] sm:$0xf]
        %v425 = vld [vmem:[%s323 + $0x248] sm:$0xf]
        %v426 = vld [vmem:[%s323 + $0x250] sm:$0xf]
        %v427 = vld [vmem:[%s323 + $0x258] sm:$0xf]
        %v428 = vld [vmem:[%s323 + $0x260] sm:$0xf]
        %v429 = vld [vmem:[%s323 + $0x268] sm:$0xf]
        %v430 = vld [vmem:[%s323 + $0x270] sm:$0xf]
        %v431 = vld [vmem:[%s323 + $0x278] sm:$0xf]
        %v432 = vld [vmem:[%s1] sm:$0xff]
        %434 = vset.pattern.permute.xlu0 0
        %435 = vperm.xlu0 %434, %v432
        %v436 = vpop.permute.xlu0 %435
        %vm438 = vcmask 293888
        %v440 = vsel %vm438, %v351, 0
        %vm442 = vcmask 1043456
        %v444 = vsel %vm442, %v416, 0
        %v447 = vsel %vm442, %v417, 0
        %v450 = vsel %vm442, %v418, 0
        %v453 = vsel %vm442, %v419, 0
        %v456 = vsel %vm442, %v420, 0
        %v459 = vsel %vm442, %v421, 0
        %v462 = vsel %vm442, %v422, 0
        %v465 = vsel %vm442, %v423, 0
        %v468 = vsel %vm442, %v424, 0
        %v471 = vsel %vm442, %v425, 0
        %v474 = vsel %vm442, %v426, 0
        %v477 = vsel %vm442, %v427, 0
        %v480 = vsel %vm442, %v428, 0
        %v483 = vsel %vm442, %v429, 0
        %v486 = vsel %vm442, %v430, 0
        %v489 = vsel %vm442, %v431, 0
        %491 = vmatprep.subr.mxu0 %v353
        %492 = vmatpush1.msra.mxu0 %v352
        %493 = vmatprep.subr.mxu0 %v369
        %494 = vmatpush1.msra.mxu0 %v368
        %495 = vmatprep.subr.mxu0 %v385
        %496 = vmatpush1.msra.mxu0 %v384
        %497 = vmatprep.subr.mxu0 %v401
        %498 = vmatpush1.msra.mxu0 %v400
        %499 = vmatprep.subr.mxu0 %v447
        %500 = vmatpush1.msra.mxu0 %v444
        %501 = vmatprep.subr.mxu0 0.0
        %502 = vmatpush1.msra.mxu0 0.0
        %503 = vmatprep.subr.mxu0 0.0
        %504 = vmatpush1.msra.mxu0 0.0
        %505 = vmatprep.subr.mxu0 0.0
        %506 = vmatpush1.msra.mxu0 0.0
        %507 = vmatprep.subr.mxu0 0.0
        %508 = vmatpush1.msra.mxu0 0.0
        %509 = vmatprep.subr.mxu0 0.0
        %510 = vmatpush1.msra.mxu0 0.0
        %511 = vmatprep.subr.mxu0 0.0
        %512 = vmatpush1.msra.mxu0 0.0
        %513 = vmatprep.subr.mxu0 0.0
        %514 = vmatpush1.msra.mxu0 0.0
        %515 = vmatprep.subr.mxu0 0.0
        %516 = vmatpush1.msra.mxu0 0.0
        %517 = vmatprep.subr.mxu0 0.0
        %518 = vmatpush1.msra.mxu0 0.0
        %519 = vmatprep.subr.mxu0 0.0
        %520 = vmatpush1.msra.mxu0 0.0
        %521 = vmatprep.subr.mxu0 0.0
        %522 = vmatpush1.msra.mxu0 0.0
        %523 = vmatprep.subr.mxu0 0.0
        %524 = vmatpush1.msra.mxu0 0.0
        %525 = vmatprep.subr.mxu0 0.0
        %526 = vmatpush1.msra.mxu0 0.0
        %527 = vmatprep.subr.mxu0 0.0
        %528 = vmatpush1.msra.mxu0 0.0
        %529 = vmatprep.subr.mxu0 0.0
        %530 = vmatpush1.msra.mxu0 0.0
        %531 = vmatprep.subr.mxu0 0.0
        %532 = vmatpush1.msra.mxu0 0.0
        %533 = vmatprep.subr.mxu0 0.0
        %534 = vmatpush1.msra.mxu0 0.0
        %535 = vmatprep.subr.mxu0 0.0
        %536 = vmatpush1.msra.mxu0 0.0
        %537 = vmatprep.subr.mxu0 0.0
        %538 = vmatpush1.msra.mxu0 0.0
        %539 = vmatprep.subr.mxu0 0.0
        %540 = vmatpush1.msra.mxu0 0.0
        %541 = vmatprep.subr.mxu0 0.0
        %542 = vmatpush1.msra.mxu0 0.0
        %543 = vmatprep.subr.mxu0 0.0
        %544 = vmatpush1.msra.mxu0 0.0
        %545 = vmatprep.subr.mxu0 0.0
        %546 = vmatpush1.msra.mxu0 0.0
        %547 = vmatprep.subr.mxu0 0.0
        %548 = vmatpush1.msra.mxu0 0.0
        %549 = vmatprep.subr.mxu0 0.0
        %550 = vmatpush1.msra.mxu0 0.0
        %551 = vmatprep.subr.mxu0 0.0
        %552 = vmatpush1.msra.mxu0 0.0
        %553 = vmatprep.subr.mxu0 0.0
        %554 = vmatpush1.msra.mxu0 0.0
        %555 = vmatprep.mubr.f32.mxu0 0.0
        %556 = vmatmul.mubr.f32.gmra.mrb[0].mxu0 %v440
        %v557 = vpop.f32.mrb[0].mxu0
        %v558 = vadd.f32 %v436, %v557
        %v559 = vpop.f32.mrb[0].mxu0
        %v560 = vadd.f32 %v436, %v559
        %561 = vdwg.mxu0
        %562 = vmatprep.subr.mxu0 %v355
        %563 = vmatpush1.msra.mxu0 %v354
        %564 = vmatprep.subr.mxu0 %v371
        %565 = vmatpush1.msra.mxu0 %v370
        %566 = vmatprep.subr.mxu0 %v387
        %567 = vmatpush1.msra.mxu0 %v386
        %568 = vmatprep.subr.mxu0 %v403
        %569 = vmatpush1.msra.mxu0 %v402
        %570 = vmatprep.subr.mxu0 %v453
        %571 = vmatpush1.msra.mxu0 %v450
        %572 = vmatprep.subr.mxu0 0.0
        %573 = vmatpush1.msra.mxu0 0.0
        %574 = vmatprep.subr.mxu0 0.0
        %575 = vmatpush1.msra.mxu0 0.0
        %576 = vmatprep.subr.mxu0 0.0
        %577 = vmatpush1.msra.mxu0 0.0
        %578 = vmatprep.subr.mxu0 0.0
        %579 = vmatpush1.msra.mxu0 0.0
        %580 = vmatprep.subr.mxu0 0.0
        %581 = vmatpush1.msra.mxu0 0.0
        %582 = vmatprep.subr.mxu0 0.0
        %583 = vmatpush1.msra.mxu0 0.0
        %584 = vmatprep.subr.mxu0 0.0
        %585 = vmatpush1.msra.mxu0 0.0
        %586 = vmatprep.subr.mxu0 0.0
        %587 = vmatpush1.msra.mxu0 0.0
        %588 = vmatprep.subr.mxu0 0.0
        %589 = vmatpush1.msra.mxu0 0.0
        %590 = vmatprep.subr.mxu0 0.0
        %591 = vmatpush1.msra.mxu0 0.0
        %592 = vmatprep.subr.mxu0 0.0
        %593 = vmatpush1.msra.mxu0 0.0
        %594 = vmatprep.subr.mxu0 0.0
        %595 = vmatpush1.msra.mxu0 0.0
        %596 = vmatprep.subr.mxu0 0.0
        %597 = vmatpush1.msra.mxu0 0.0
        %598 = vmatprep.subr.mxu0 0.0
        %599 = vmatpush1.msra.mxu0 0.0
        %600 = vmatprep.subr.mxu0 0.0
        %601 = vmatpush1.msra.mxu0 0.0
        %602 = vmatprep.subr.mxu0 0.0
        %603 = vmatpush1.msra.mxu0 0.0
        %604 = vmatprep.subr.mxu0 0.0
        %605 = vmatpush1.msra.mxu0 0.0
        %606 = vmatprep.subr.mxu0 0.0
        %607 = vmatpush1.msra.mxu0 0.0
        %608 = vmatprep.subr.mxu0 0.0
        %609 = vmatpush1.msra.mxu0 0.0
        %610 = vmatprep.subr.mxu0 0.0
        %611 = vmatpush1.msra.mxu0 0.0
        %612 = vmatprep.subr.mxu0 0.0
        %613 = vmatpush1.msra.mxu0 0.0
        %614 = vmatprep.subr.mxu0 0.0
        %615 = vmatpush1.msra.mxu0 0.0
        %616 = vmatprep.subr.mxu0 0.0
        %617 = vmatpush1.msra.mxu0 0.0
        %618 = vmatprep.subr.mxu0 0.0
        %619 = vmatpush1.msra.mxu0 0.0
        %620 = vmatprep.subr.mxu0 0.0
        %621 = vmatpush1.msra.mxu0 0.0
        %622 = vmatprep.subr.mxu0 0.0
        %623 = vmatpush1.msra.mxu0 0.0
        %624 = vmatprep.subr.mxu0 0.0
        %625 = vmatpush1.msra.mxu0 0.0
        %626 = vmatprep.mubr.f32.mxu0 0.0
        %627 = vmatmul.mubr.f32.gmra.mrb[0].mxu0 %v440
        %v628 = vpop.f32.mrb[0].mxu0
        %v629 = vadd.f32 %v436, %v628
        %v630 = vpop.f32.mrb[0].mxu0
        %v631 = vadd.f32 %v436, %v630
        %632 = vdwg.mxu0
        %633 = vmatprep.subr.mxu0 %v357
        %634 = vmatpush1.msra.mxu0 %v356
        %635 = vmatprep.subr.mxu0 %v373
        %636 = vmatpush1.msra.mxu0 %v372
        %637 = vmatprep.subr.mxu0 %v389
        %638 = vmatpush1.msra.mxu0 %v388
        %639 = vmatprep.subr.mxu0 %v405
        %640 = vmatpush1.msra.mxu0 %v404
        %641 = vmatprep.subr.mxu0 %v459
        %642 = vmatpush1.msra.mxu0 %v456
        %643 = vmatprep.subr.mxu0 0.0
        %644 = vmatpush1.msra.mxu0 0.0
        %645 = vmatprep.subr.mxu0 0.0
        %646 = vmatpush1.msra.mxu0 0.0
        %647 = vmatprep.subr.mxu0 0.0
        %648 = vmatpush1.msra.mxu0 0.0
        %649 = vmatprep.subr.mxu0 0.0
        %650 = vmatpush1.msra.mxu0 0.0
        %651 = vmatprep.subr.mxu0 0.0
        %652 = vmatpush1.msra.mxu0 0.0
        %653 = vmatprep.subr.mxu0 0.0
        %654 = vmatpush1.msra.mxu0 0.0
        %655 = vmatprep.subr.mxu0 0.0
        %656 = vmatpush1.msra.mxu0 0.0
        %657 = vmatprep.subr.mxu0 0.0
        %658 = vmatpush1.msra.mxu0 0.0
        %659 = vmatprep.subr.mxu0 0.0
        %660 = vmatpush1.msra.mxu0 0.0
        %661 = vmatprep.subr.mxu0 0.0
        %662 = vmatpush1.msra.mxu0 0.0
        %663 = vmatprep.subr.mxu0 0.0
        %664 = vmatpush1.msra.mxu0 0.0
        %665 = vmatprep.subr.mxu0 0.0
        %666 = vmatpush1.msra.mxu0 0.0
        %667 = vmatprep.subr.mxu0 0.0
        %668 = vmatpush1.msra.mxu0 0.0
        %669 = vmatprep.subr.mxu0 0.0
        %670 = vmatpush1.msra.mxu0 0.0
        %671 = vmatprep.subr.mxu0 0.0
        %672 = vmatpush1.msra.mxu0 0.0
        %673 = vmatprep.subr.mxu0 0.0
        %674 = vmatpush1.msra.mxu0 0.0
        %675 = vmatprep.subr.mxu0 0.0
        %676 = vmatpush1.msra.mxu0 0.0
        %677 = vmatprep.subr.mxu0 0.0
        %678 = vmatpush1.msra.mxu0 0.0
        %679 = vmatprep.subr.mxu0 0.0
        %680 = vmatpush1.msra.mxu0 0.0
        %681 = vmatprep.subr.mxu0 0.0
        %682 = vmatpush1.msra.mxu0 0.0
        %683 = vmatprep.subr.mxu0 0.0
        %684 = vmatpush1.msra.mxu0 0.0
        %685 = vmatprep.subr.mxu0 0.0
        %686 = vmatpush1.msra.mxu0 0.0
        %687 = vmatprep.subr.mxu0 0.0
        %688 = vmatpush1.msra.mxu0 0.0
        %689 = vmatprep.subr.mxu0 0.0
        %690 = vmatpush1.msra.mxu0 0.0
        %691 = vmatprep.subr.mxu0 0.0
        %692 = vmatpush1.msra.mxu0 0.0
        %693 = vmatprep.subr.mxu0 0.0
        %694 = vmatpush1.msra.mxu0 0.0
        %695 = vmatprep.subr.mxu0 0.0
        %696 = vmatpush1.msra.mxu0 0.0
        %697 = vmatprep.mubr.f32.mxu0 0.0
        %698 = vmatmul.mubr.f32.gmra.mrb[0].mxu0 %v440
        %v699 = vpop.f32.mrb[0].mxu0
        %v700 = vadd.f32 %v436, %v699
        %v701 = vpop.f32.mrb[0].mxu0
        %v702 = vadd.f32 %v436, %v701
        %703 = vdwg.mxu0
        %704 = vmatprep.subr.mxu0 %v359
        %705 = vmatpush1.msra.mxu0 %v358
        %706 = vmatprep.subr.mxu0 %v375
        %707 = vmatpush1.msra.mxu0 %v374
        %708 = vmatprep.subr.mxu0 %v391
        %709 = vmatpush1.msra.mxu0 %v390
        %710 = vmatprep.subr.mxu0 %v407
        %711 = vmatpush1.msra.mxu0 %v406
        %712 = vmatprep.subr.mxu0 %v465
        %713 = vmatpush1.msra.mxu0 %v462
        %714 = vmatprep.subr.mxu0 0.0
        %715 = vmatpush1.msra.mxu0 0.0
        %716 = vmatprep.subr.mxu0 0.0
        %717 = vmatpush1.msra.mxu0 0.0
        %718 = vmatprep.subr.mxu0 0.0
        %719 = vmatpush1.msra.mxu0 0.0
        %720 = vmatprep.subr.mxu0 0.0
        %721 = vmatpush1.msra.mxu0 0.0
        %722 = vmatprep.subr.mxu0 0.0
        %723 = vmatpush1.msra.mxu0 0.0
        %724 = vmatprep.subr.mxu0 0.0
        %725 = vmatpush1.msra.mxu0 0.0
        %726 = vmatprep.subr.mxu0 0.0
        %727 = vmatpush1.msra.mxu0 0.0
        %728 = vmatprep.subr.mxu0 0.0
        %729 = vmatpush1.msra.mxu0 0.0
        %730 = vmatprep.subr.mxu0 0.0
        %731 = vmatpush1.msra.mxu0 0.0
        %732 = vmatprep.subr.mxu0 0.0
        %733 = vmatpush1.msra.mxu0 0.0
        %734 = vmatprep.subr.mxu0 0.0
        %735 = vmatpush1.msra.mxu0 0.0
        %736 = vmatprep.subr.mxu0 0.0
        %737 = vmatpush1.msra.mxu0 0.0
        %738 = vmatprep.subr.mxu0 0.0
        %739 = vmatpush1.msra.mxu0 0.0
        %740 = vmatprep.subr.mxu0 0.0
        %741 = vmatpush1.msra.mxu0 0.0
        %742 = vmatprep.subr.mxu0 0.0
        %743 = vmatpush1.msra.mxu0 0.0
        %744 = vmatprep.subr.mxu0 0.0
        %745 = vmatpush1.msra.mxu0 0.0
        %746 = vmatprep.subr.mxu0 0.0
        %747 = vmatpush1.msra.mxu0 0.0
        %748 = vmatprep.subr.mxu0 0.0
        %749 = vmatpush1.msra.mxu0 0.0
        %750 = vmatprep.subr.mxu0 0.0
        %751 = vmatpush1.msra.mxu0 0.0
        %752 = vmatprep.subr.mxu0 0.0
        %753 = vmatpush1.msra.mxu0 0.0
        %754 = vmatprep.subr.mxu0 0.0
        %755 = vmatpush1.msra.mxu0 0.0
        %756 = vmatprep.subr.mxu0 0.0
        %757 = vmatpush1.msra.mxu0 0.0
        %758 = vmatprep.subr.mxu0 0.0
        %759 = vmatpush1.msra.mxu0 0.0
        %760 = vmatprep.subr.mxu0 0.0
        %761 = vmatpush1.msra.mxu0 0.0
        %762 = vmatprep.subr.mxu0 0.0
        %763 = vmatpush1.msra.mxu0 0.0
        %764 = vmatprep.subr.mxu0 0.0
        %765 = vmatpush1.msra.mxu0 0.0
        %766 = vmatprep.subr.mxu0 0.0
        %767 = vmatpush1.msra.mxu0 0.0
        %768 = vmatprep.mubr.f32.mxu0 0.0
        %769 = vmatmul.mubr.f32.gmra.mrb[0].mxu0 %v440
        %v770 = vpop.f32.mrb[0].mxu0
        %v771 = vadd.f32 %v436, %v770
        %v772 = vpop.f32.mrb[0].mxu0
        %v773 = vadd.f32 %v436, %v772
        %774 = vdwg.mxu0
        %775 = vmatprep.subr.mxu0 %v361
        %776 = vmatpush1.msra.mxu0 %v360
        %777 = vmatprep.subr.mxu0 %v377
        %778 = vmatpush1.msra.mxu0 %v376
        %779 = vmatprep.subr.mxu0 %v393
        %780 = vmatpush1.msra.mxu0 %v392
        %781 = vmatprep.subr.mxu0 %v409
        %782 = vmatpush1.msra.mxu0 %v408
        %783 = vmatprep.subr.mxu0 %v471
        %784 = vmatpush1.msra.mxu0 %v468
        %785 = vmatprep.subr.mxu0 0.0
        %786 = vmatpush1.msra.mxu0 0.0
        %787 = vmatprep.subr.mxu0 0.0
        %788 = vmatpush1.msra.mxu0 0.0
        %789 = vmatprep.subr.mxu0 0.0
        %790 = vmatpush1.msra.mxu0 0.0
        %791 = vmatprep.subr.mxu0 0.0
        %792 = vmatpush1.msra.mxu0 0.0
        %793 = vmatprep.subr.mxu0 0.0
        %794 = vmatpush1.msra.mxu0 0.0
        %795 = vmatprep.subr.mxu0 0.0
        %796 = vmatpush1.msra.mxu0 0.0
        %797 = vmatprep.subr.mxu0 0.0
        %798 = vmatpush1.msra.mxu0 0.0
        %799 = vmatprep.subr.mxu0 0.0
        %800 = vmatpush1.msra.mxu0 0.0
        %801 = vmatprep.subr.mxu0 0.0
        %802 = vmatpush1.msra.mxu0 0.0
        %803 = vmatprep.subr.mxu0 0.0
        %804 = vmatpush1.msra.mxu0 0.0
        %805 = vmatprep.subr.mxu0 0.0
        %806 = vmatpush1.msra.mxu0 0.0
        %807 = vmatprep.subr.mxu0 0.0
        %808 = vmatpush1.msra.mxu0 0.0
        %809 = vmatprep.subr.mxu0 0.0
        %810 = vmatpush1.msra.mxu0 0.0
        %811 = vmatprep.subr.mxu0 0.0
        %812 = vmatpush1.msra.mxu0 0.0
        %813 = vmatprep.subr.mxu0 0.0
        %814 = vmatpush1.msra.mxu0 0.0
        %815 = vmatprep.subr.mxu0 0.0
        %816 = vmatpush1.msra.mxu0 0.0
        %817 = vmatprep.subr.mxu0 0.0
        %818 = vmatpush1.msra.mxu0 0.0
        %819 = vmatprep.subr.mxu0 0.0
        %820 = vmatpush1.msra.mxu0 0.0
        %821 = vmatprep.subr.mxu0 0.0
        %822 = vmatpush1.msra.mxu0 0.0
        %823 = vmatprep.subr.mxu0 0.0
        %824 = vmatpush1.msra.mxu0 0.0
        %825 = vmatprep.subr.mxu0 0.0
        %826 = vmatpush1.msra.mxu0 0.0
        %827 = vmatprep.subr.mxu0 0.0
        %828 = vmatpush1.msra.mxu0 0.0
        %829 = vmatprep.subr.mxu0 0.0
        %830 = vmatpush1.msra.mxu0 0.0
        %831 = vmatprep.subr.mxu0 0.0
        %832 = vmatpush1.msra.mxu0 0.0
        %833 = vmatprep.subr.mxu0 0.0
        %834 = vmatpush1.msra.mxu0 0.0
        %835 = vmatprep.subr.mxu0 0.0
        %836 = vmatpush1.msra.mxu0 0.0
        %837 = vmatprep.subr.mxu0 0.0
        %838 = vmatpush1.msra.mxu0 0.0
        %839 = vmatprep.mubr.f32.mxu0 0.0
        %840 = vmatmul.mubr.f32.gmra.mrb[0].mxu0 %v440
        %v841 = vpop.f32.mrb[0].mxu0
        %v842 = vadd.f32 %v436, %v841
        %v843 = vpop.f32.mrb[0].mxu0
        %v844 = vadd.f32 %v436, %v843
        %845 = vdwg.mxu0
        %846 = vmatprep.subr.mxu0 %v363
        %847 = vmatpush1.msra.mxu0 %v362
        %848 = vmatprep.subr.mxu0 %v379
        %849 = vmatpush1.msra.mxu0 %v378
        %850 = vmatprep.subr.mxu0 %v395
        %851 = vmatpush1.msra.mxu0 %v394
        %852 = vmatprep.subr.mxu0 %v411
        %853 = vmatpush1.msra.mxu0 %v410
        %854 = vmatprep.subr.mxu0 %v477
        %855 = vmatpush1.msra.mxu0 %v474
        %856 = vmatprep.subr.mxu0 0.0
        %857 = vmatpush1.msra.mxu0 0.0
        %858 = vmatprep.subr.mxu0 0.0
        %859 = vmatpush1.msra.mxu0 0.0
        %860 = vmatprep.subr.mxu0 0.0
        %861 = vmatpush1.msra.mxu0 0.0
        %862 = vmatprep.subr.mxu0 0.0
        %863 = vmatpush1.msra.mxu0 0.0
        %864 = vmatprep.subr.mxu0 0.0
        %865 = vmatpush1.msra.mxu0 0.0
        %866 = vmatprep.subr.mxu0 0.0
        %867 = vmatpush1.msra.mxu0 0.0
        %868 = vmatprep.subr.mxu0 0.0
        %869 = vmatpush1.msra.mxu0 0.0
        %870 = vmatprep.subr.mxu0 0.0
        %871 = vmatpush1.msra.mxu0 0.0
        %872 = vmatprep.subr.mxu0 0.0
        %873 = vmatpush1.msra.mxu0 0.0
        %874 = vmatprep.subr.mxu0 0.0
        %875 = vmatpush1.msra.mxu0 0.0
        %876 = vmatprep.subr.mxu0 0.0
        %877 = vmatpush1.msra.mxu0 0.0
        %878 = vmatprep.subr.mxu0 0.0
        %879 = vmatpush1.msra.mxu0 0.0
        %880 = vmatprep.subr.mxu0 0.0
        %881 = vmatpush1.msra.mxu0 0.0
        %882 = vmatprep.subr.mxu0 0.0
        %883 = vmatpush1.msra.mxu0 0.0
        %884 = vmatprep.subr.mxu0 0.0
        %885 = vmatpush1.msra.mxu0 0.0
        %886 = vmatprep.subr.mxu0 0.0
        %887 = vmatpush1.msra.mxu0 0.0
        %888 = vmatprep.subr.mxu0 0.0
        %889 = vmatpush1.msra.mxu0 0.0
        %890 = vmatprep.subr.mxu0 0.0
        %891 = vmatpush1.msra.mxu0 0.0
        %892 = vmatprep.subr.mxu0 0.0
        %893 = vmatpush1.msra.mxu0 0.0
        %894 = vmatprep.subr.mxu0 0.0
        %895 = vmatpush1.msra.mxu0 0.0
        %896 = vmatprep.subr.mxu0 0.0
        %897 = vmatpush1.msra.mxu0 0.0
        %898 = vmatprep.subr.mxu0 0.0
        %899 = vmatpush1.msra.mxu0 0.0
        %900 = vmatprep.subr.mxu0 0.0
        %901 = vmatpush1.msra.mxu0 0.0
        %902 = vmatprep.subr.mxu0 0.0
        %903 = vmatpush1.msra.mxu0 0.0
        %904 = vmatprep.subr.mxu0 0.0
        %905 = vmatpush1.msra.mxu0 0.0
        %906 = vmatprep.subr.mxu0 0.0
        %907 = vmatpush1.msra.mxu0 0.0
        %908 = vmatprep.subr.mxu0 0.0
        %909 = vmatpush1.msra.mxu0 0.0
        %910 = vmatprep.mubr.f32.mxu0 0.0
        %911 = vmatmul.mubr.f32.gmra.mrb[0].mxu0 %v440
        %v912 = vpop.f32.mrb[0].mxu0
        %v913 = vadd.f32 %v436, %v912
        %v914 = vpop.f32.mrb[0].mxu0
        %v915 = vadd.f32 %v436, %v914
        %916 = vdwg.mxu0
        %917 = vmatprep.subr.mxu0 %v365
        %918 = vmatpush1.msra.mxu0 %v364
        %919 = vmatprep.subr.mxu0 %v381
        %920 = vmatpush1.msra.mxu0 %v380
        %921 = vmatprep.subr.mxu0 %v397
        %922 = vmatpush1.msra.mxu0 %v396
        %923 = vmatprep.subr.mxu0 %v413
        %924 = vmatpush1.msra.mxu0 %v412
        %925 = vmatprep.subr.mxu0 %v483
        %926 = vmatpush1.msra.mxu0 %v480
        %927 = vmatprep.subr.mxu0 0.0
        %928 = vmatpush1.msra.mxu0 0.0
        %929 = vmatprep.subr.mxu0 0.0
        %930 = vmatpush1.msra.mxu0 0.0
        %931 = vmatprep.subr.mxu0 0.0
        %932 = vmatpush1.msra.mxu0 0.0
        %933 = vmatprep.subr.mxu0 0.0
        %934 = vmatpush1.msra.mxu0 0.0
        %935 = vmatprep.subr.mxu0 0.0
        %936 = vmatpush1.msra.mxu0 0.0
        %937 = vmatprep.subr.mxu0 0.0
        %938 = vmatpush1.msra.mxu0 0.0
        %939 = vmatprep.subr.mxu0 0.0
        %940 = vmatpush1.msra.mxu0 0.0
        %941 = vmatprep.subr.mxu0 0.0
        %942 = vmatpush1.msra.mxu0 0.0
        %943 = vmatprep.subr.mxu0 0.0
        %944 = vmatpush1.msra.mxu0 0.0
        %945 = vmatprep.subr.mxu0 0.0
        %946 = vmatpush1.msra.mxu0 0.0
        %947 = vmatprep.subr.mxu0 0.0
        %948 = vmatpush1.msra.mxu0 0.0
        %949 = vmatprep.subr.mxu0 0.0
        %950 = vmatpush1.msra.mxu0 0.0
        %951 = vmatprep.subr.mxu0 0.0
        %952 = vmatpush1.msra.mxu0 0.0
        %953 = vmatprep.subr.mxu0 0.0
        %954 = vmatpush1.msra.mxu0 0.0
        %955 = vmatprep.subr.mxu0 0.0
        %956 = vmatpush1.msra.mxu0 0.0
        %957 = vmatprep.subr.mxu0 0.0
        %958 = vmatpush1.msra.mxu0 0.0
        %959 = vmatprep.subr.mxu0 0.0
        %960 = vmatpush1.msra.mxu0 0.0
        %961 = vmatprep.subr.mxu0 0.0
        %962 = vmatpush1.msra.mxu0 0.0
        %963 = vmatprep.subr.mxu0 0.0
        %964 = vmatpush1.msra.mxu0 0.0
        %965 = vmatprep.subr.mxu0 0.0
        %966 = vmatpush1.msra.mxu0 0.0
        %967 = vmatprep.subr.mxu0 0.0
        %968 = vmatpush1.msra.mxu0 0.0
        %969 = vmatprep.subr.mxu0 0.0
        %970 = vmatpush1.msra.mxu0 0.0
        %971 = vmatprep.subr.mxu0 0.0
        %972 = vmatpush1.msra.mxu0 0.0
        %973 = vmatprep.subr.mxu0 0.0
        %974 = vmatpush1.msra.mxu0 0.0
        %975 = vmatprep.subr.mxu0 0.0
        %976 = vmatpush1.msra.mxu0 0.0
        %977 = vmatprep.subr.mxu0 0.0
        %978 = vmatpush1.msra.mxu0 0.0
        %979 = vmatprep.subr.mxu0 0.0
        %980 = vmatpush1.msra.mxu0 0.0
        %981 = vmatprep.mubr.f32.mxu0 0.0
        %982 = vmatmul.mubr.f32.gmra.mrb[0].mxu0 %v440
        %v983 = vpop.f32.mrb[0].mxu0
        %v984 = vadd.f32 %v436, %v983
        %v985 = vpop.f32.mrb[0].mxu0
        %v986 = vadd.f32 %v436, %v985
        %987 = vdwg.mxu0
        %988 = vmatprep.subr.mxu0 %v367
        %989 = vmatpush1.msra.mxu0 %v366
        %990 = vmatprep.subr.mxu0 %v383
        %991 = vmatpush1.msra.mxu0 %v382
        %992 = vmatprep.subr.mxu0 %v399
        %993 = vmatpush1.msra.mxu0 %v398
        %994 = vmatprep.subr.mxu0 %v415
        %995 = vmatpush1.msra.mxu0 %v414
        %996 = vmatprep.subr.mxu0 %v489
        %997 = vmatpush1.msra.mxu0 %v486
        %998 = vmatprep.subr.mxu0 0.0
        %999 = vmatpush1.msra.mxu0 0.0
        %1000 = vmatprep.subr.mxu0 0.0
        %1001 = vmatpush1.msra.mxu0 0.0
        %1002 = vmatprep.subr.mxu0 0.0
        %1003 = vmatpush1.msra.mxu0 0.0
        %1004 = vmatprep.subr.mxu0 0.0
        %1005 = vmatpush1.msra.mxu0 0.0
        %1006 = vmatprep.subr.mxu0 0.0
        %1007 = vmatpush1.msra.mxu0 0.0
        %1008 = vmatprep.subr.mxu0 0.0
        %1009 = vmatpush1.msra.mxu0 0.0
        %1010 = vmatprep.subr.mxu0 0.0
        %1011 = vmatpush1.msra.mxu0 0.0
        %1012 = vmatprep.subr.mxu0 0.0
        %1013 = vmatpush1.msra.mxu0 0.0
        %1014 = vmatprep.subr.mxu0 0.0
        %1015 = vmatpush1.msra.mxu0 0.0
        %1016 = vmatprep.subr.mxu0 0.0
        %1017 = vmatpush1.msra.mxu0 0.0
        %1018 = vmatprep.subr.mxu0 0.0
        %1019 = vmatpush1.msra.mxu0 0.0
        %1020 = vmatprep.subr.mxu0 0.0
        %1021 = vmatpush1.msra.mxu0 0.0
        %1022 = vmatprep.subr.mxu0 0.0
        %1023 = vmatpush1.msra.mxu0 0.0
        %1024 = vmatprep.subr.mxu0 0.0
        %1025 = vmatpush1.msra.mxu0 0.0
        %1026 = vmatprep.subr.mxu0 0.0
        %1027 = vmatpush1.msra.mxu0 0.0
        %1028 = vmatprep.subr.mxu0 0.0
        %1029 = vmatpush1.msra.mxu0 0.0
        %1030 = vmatprep.subr.mxu0 0.0
        %1031 = vmatpush1.msra.mxu0 0.0
        %1032 = vmatprep.subr.mxu0 0.0
        %1033 = vmatpush1.msra.mxu0 0.0
        %1034 = vmatprep.subr.mxu0 0.0
        %1035 = vmatpush1.msra.mxu0 0.0
        %1036 = vmatprep.subr.mxu0 0.0
        %1037 = vmatpush1.msra.mxu0 0.0
        %1038 = vmatprep.subr.mxu0 0.0
        %1039 = vmatpush1.msra.mxu0 0.0
        %1040 = vmatprep.subr.mxu0 0.0
        %1041 = vmatpush1.msra.mxu0 0.0
        %1042 = vmatprep.subr.mxu0 0.0
        %1043 = vmatpush1.msra.mxu0 0.0
        %1044 = vmatprep.subr.mxu0 0.0
        %1045 = vmatpush1.msra.mxu0 0.0
        %1046 = vmatprep.subr.mxu0 0.0
        %1047 = vmatpush1.msra.mxu0 0.0
        %1048 = vmatprep.subr.mxu0 0.0
        %1049 = vmatpush1.msra.mxu0 0.0
        %1050 = vmatprep.subr.mxu0 0.0
        %1051 = vmatpush1.msra.mxu0 0.0
        %1052 = vmatprep.mubr.f32.mxu0 0.0
        %1053 = vmatmul.mubr.f32.gmra.mrb[0].mxu0 %v440
        %v1054 = vpop.f32.mrb[0].mxu0
        %v1055 = vadd.f32 %v436, %v1054
        %v1056 = vpop.f32.mrb[0].mxu0
        %v1057 = vadd.f32 %v436, %v1056
        %1058 = vdwg.mxu0
        %1059 = vst [vmem:[%s349] sm:$0xff] %v558
        %1060 = vst [vmem:[%s349 + $0x8] sm:$0xff] %v560
        %1061 = vst [vmem:[%s349 + $0x10] sm:$0xff] %v629
        %1062 = vst [vmem:[%s349 + $0x18] sm:$0xff] %v631
        %1063 = vst [vmem:[%s349 + $0x20] sm:$0xff] %v700
        %1064 = vst [vmem:[%s349 + $0x28] sm:$0xff] %v702
        %1065 = vst [vmem:[%s349 + $0x30] sm:$0xff] %v771
        %1066 = vst [vmem:[%s349 + $0x38] sm:$0xff] %v773
        %1067 = vst [vmem:[%s349 + $0x40] sm:$0xff] %v842
        %1068 = vst [vmem:[%s349 + $0x48] sm:$0xff] %v844
        %1069 = vst [vmem:[%s349 + $0x50] sm:$0xff] %v913
        %1070 = vst [vmem:[%s349 + $0x58] sm:$0xff] %v915
        %1071 = vst [vmem:[%s349 + $0x60] sm:$0xff] %v984
        %1072 = vst [vmem:[%s349 + $0x68] sm:$0xff] %v986
        %1073 = vst [vmem:[%s349 + $0x70] sm:$0xff] %v1055
        %1074 = vst [vmem:[%s349 + $0x78] sm:$0xff] %v1057
        %s1075 = smul.u32 16, %s14
        %p1076 = scmp.lt.s32.totalorder %s1075, 31
        %s1077 = scalar_select %p1076, %s1075, 31
        %s1078 = smul.addr %s1077, 8
        %s1079 = scalar_lea.vmem %s3, %s1078
        // Predicated region
        $region56: #{synapse_conv_forward.1} parent=50 // pred_check
          %p1080 = pneg %p100
        $region57: #{synapse_conv_forward.1} parent=50 // pred_check_branch
          %1082 = sbr.rel (%p1080) target = $region59
        $region58: #{synapse_conv_forward.1} parent=50 // pred_region
          %s1083 = smul.u32 16, %s14
        $region59: #{synapse_conv_forward.1} parent=50 // pred_fallthru
          _
      $region51: #{synapse_conv_forward.1} parent=5 // pred_fallthru
        _
      %p1084 = scmp.le.s32.totalorder 2, %s9
      // Predicated region
      $region60: #{synapse_conv_forward.1} parent=5 // pred_check
        %p1085 = pneg %p1084
      $region61: #{synapse_conv_forward.1} parent=5 // pred_check_branch
        %1087 = sbr.rel (%p1085) target = $region63
      $region62: #{synapse_conv_forward.1} parent=5 // pred_region
        %s1088 = ssub.s32 %s9, 2
        // Predicated region
        $region64: #{synapse_conv_forward.1} parent=62 // pred_check
          %p1089 = pneg %p106
        $region65: #{synapse_conv_forward.1} parent=62 // pred_check_branch
          %1091 = sbr.rel (%p1089) target = $region67
        $region66: #{synapse_conv_forward.1} parent=62 // pred_region
          %s1092 = smul.u32 16, %s15
          %p1093 = scmp.lt.s32.totalorder %s1092, 31
          %s1094 = scalar_select %p1093, %s1092, 31
          %s1095 = smul.addr %s1094, 8
          %s1096 = scalar_lea.vmem %s3, %s1095
        $region67: #{synapse_conv_forward.1} parent=62 // pred_fallthru
          _
      $region63: #{synapse_conv_forward.1} parent=5 // pred_fallthru
        _
    $region6: #{synapse_conv_forward.1} parent=1 // loop_footer
      %s13 = sadd.s32 1, %s9
    $region7: #{synapse_conv_forward.1} parent=1 // loop_footer_branch
      %8 = sbr.rel target = $region3
    $region8: #{synapse_conv_forward.1} parent=1 // loop_exit
      _

</llo_original>
